<compile_context>
chip_gen: v6e
topology: v6e:2x2x1
jax: 0.10.0
libtpu: 0.0.40
codegen_flags: <defaults>
</compile_context>

<pallas_src>
import functools

import jax
import jax.numpy as jnp
from jax.experimental import pallas as pl
from jax.experimental.pallas import tpu as pltpu


def _round_up(x: int, m: int) -> int:
    return (x + m - 1) // m * m


def _bigram_kernel(idx_ref, table_ref, out_ref):
    # idx_ref:   (1, tile_m)      int32   token ids for this row tile (lane-dense)
    # table_ref: (V, V_pad)       float32 full (lane-padded) embedding table
    # out_ref:   (tile_m, V_pad)  logits for this row tile
    ids = idx_ref[...]                                   # (1, tile_m)
    tile_m = ids.shape[1]
    v_rows = table_ref.shape[0]                          # contracting dim = V
    sub_iota = jax.lax.broadcasted_iota(jnp.int32, (v_rows, tile_m), 0)
    one_hot_t = (sub_iota == ids).astype(table_ref.dtype)  # (V, tile_m)
    # Contract one_hot_T axis 0 with table axis 0 -> (tile_m, V_pad) on the MXU.
    logits = jax.lax.dot_general(
        one_hot_t, table_ref[...],
        dimension_numbers=(((0,), (0,)), ((), ())),
        preferred_element_type=jnp.float32)
    out_ref[...] = logits.astype(out_ref.dtype)


def _tile_plan(M: int, device_kind: str):
    """Generation-aware row tiling: tile_m, M_pad, grid_m."""
    kind = (device_kind or "").lower()
    if "v7" in kind:
        target, num_tc = 4096, 2      # ~2 MiB/step at V_pad=128; 2 TCs/chip
    elif "v6" in kind:
        target, num_tc = 2048, 1      # ~1 MiB/step at ~1.4 TB/s
    else:
        target, num_tc = 1024, 1      # v5e / unknown: ~0.5 MiB/step
    align = 128 if M >= 256 else 8    # lane-dense id loads when M allows it
    if M <= target:
        if num_tc >= 2 and M > align:
            # Split tiny problems only on multi-TC parts (v7x).
            tile_m = _round_up(pl.cdiv(M, 2), align)
        else:
            tile_m = _round_up(M, align)
    else:
        tile_m = target
    M_pad = _round_up(M, tile_m)
    return tile_m, M_pad, M_pad // tile_m


def make_bigram_forward(embedding_table, *, out_dtype=None):
    """Returns a jitted forward(input_index, targets) -> (B, T, V) logits.

    The embedding table is lane-padded to a multiple of 128 once, here,
    not on every forward call.  `out_dtype` (e.g. jnp.bfloat16) is an opt-in
    to halve logits writeback; default keeps the table dtype (f32).
    """
    V, V_feat = embedding_table.shape
    V_pad = _round_up(V_feat, 128)
    table = embedding_table
    if V_pad != V_feat:
        table = jnp.pad(table, ((0, 0), (0, V_pad - V_feat)))
    out_dtype = out_dtype or embedding_table.dtype

    try:
        device_kind = jax.devices()[0].device_kind
    except Exception:
        device_kind = ""

    @jax.jit
    def _forward(input_index, table_padded):
        B, T = input_index.shape
        M = B * T
        tile_m, M_pad, grid_m = _tile_plan(M, device_kind)

        idx = input_index.reshape(-1).astype(jnp.int32)
        if M_pad != M:
            idx = jnp.pad(idx, (0, M_pad - M))          # padded rows use id 0
        idx = idx.reshape(grid_m, 1, tile_m)            # lane-dense id layout

        grid_spec = pltpu.PrefetchScalarGridSpec(
            num_scalar_prefetch=0,
            grid=(grid_m,),
            in_specs=[
                # (1, tile_m) id row per grid step; leading dim squeezed.
                pl.BlockSpec((None, 1, tile_m), lambda m: (m, 0, 0)),
                # Full (V, V_pad) table, same block every step.
                pl.BlockSpec((V, V_pad), lambda m: (0, 0)),
            ],
            # Lane-dense output tile: V_pad is a multiple of 128.
            out_specs=pl.BlockSpec((tile_m, V_pad), lambda m: (m, 0)),
        )

        out = pl.pallas_call(
            _bigram_kernel,
            out_shape=jax.ShapeDtypeStruct((M_pad, V_pad), out_dtype),
            grid_spec=grid_spec,
            compiler_params=pltpu.CompilerParams(
                dimension_semantics=("parallel",)),
        )(idx, table_padded)

        if M_pad != M or V_pad != V_feat:
            out = out[:M, :V_feat]                      # only when padding happened
        return out.reshape(B, T, V_feat)

    def forward(input_index, targets=None):
        del targets  # forward just returns the logits (matches PyTorch module)
        return _forward(input_index, table)

    return forward


if __name__ == "__main__":
    key = jax.random.PRNGKey(0)
    k_table, k_idx = jax.random.split(key)

    vocab_size = 128   # V: embedding table is (V, V) per the module __init__
    batch = 2
    seq = 8

    # Deterministic parameter init (matches nn.Embedding's N(0,1) default).
    embedding_table = jax.random.normal(
        k_table, (vocab_size, vocab_size), dtype=jnp.float32)

    input_index = jax.random.randint(
        k_idx, (batch, seq), 0, vocab_size, dtype=jnp.int32)
    targets = jax.random.randint(
        jax.random.PRNGKey(1), (batch, seq), 0, vocab_size, dtype=jnp.int32)

    forward = make_bigram_forward(embedding_table)
    logits = forward(input_index, targets)
    logits = jax.block_until_ready(logits)

    # Reference check: plain-JAX embedding gather.
    ref = jnp.take(embedding_table, input_index, axis=0)
    assert logits.shape == (batch, seq, vocab_size)
    assert jnp.allclose(logits, ref, atol=1e-6), "mismatch vs reference gather"

    print("KERNEL_OK")
</pallas_src>

<mosaic_0001>
module attributes {stable_mosaic.version = 11 : i64} {
  func.func @_bigram_kernel(%arg0: i32, %arg1: memref<1x1x16xi32, #tpu.memory_space<vmem>>, %arg2: memref<128x128xf32, #tpu.memory_space<vmem>>, %arg3: memref<16x128xf32, #tpu.memory_space<vmem>>) attributes {dimension_semantics = [#tpu.dimension_semantics<parallel>], iteration_bounds = array<i64: 1>, scalar_prefetch = 0 : i64, scratch_operands = 0 : i64, tpu.core_type = #tpu.core_type<tc>, window_params = [{transform_indices = @transform_0, window_bounds = array<i64: 1, 1, 16>}, {pipeline_mode = #tpu.pipeline_mode<synchronous>, transform_indices = @transform_1, window_bounds = array<i64: 128, 128>}, {transform_indices = @transform_2, window_bounds = array<i64: 16, 128>}]} {
    %c0 = arith.constant 0 : index
    %c0_0 = arith.constant 0 : index
    %c0_1 = arith.constant 0 : index
    %0 = vector.load %arg1[%c0, %c0_0, %c0_1] : memref<1x1x16xi32, #tpu.memory_space<vmem>>, vector<1x1x16xi32>
    %1 = vector.shape_cast %0 : vector<1x1x16xi32> to vector<1x16xi32>
    %2 = tpu.iota {dimensions = array<i32: 0>} : vector<128x16xi32>
    %3 = vector.broadcast %1 : vector<1x16xi32> to vector<128x16xi32>
    %4 = arith.cmpi eq, %2, %3 : vector<128x16xi32>
    %5 = arith.extui %4 : vector<128x16xi1> to vector<128x16xi32>
    %6 = arith.sitofp %5 : vector<128x16xi32> to vector<128x16xf32>
    %c0_2 = arith.constant 0 : index
    %c0_3 = arith.constant 0 : index
    %7 = vector.load %arg2[%c0_2, %c0_3] : memref<128x128xf32, #tpu.memory_space<vmem>>, vector<128x128xf32>
    %cst = arith.constant dense<0.000000e+00> : vector<16x128xf32>
    %8 = tpu.matmul %6, %7, %cst {dimension_numbers = #tpu.dot_dimension_numbers<[0], [0], [1], [1], [0, 1, 1, 1], [], []>} : vector<128x16xf32>, vector<128x128xf32>, vector<16x128xf32> -> vector<16x128xf32>
    %c0_4 = arith.constant 0 : index
    %c0_5 = arith.constant 0 : index
    %9 = vector.load %arg3[%c0_4, %c0_5] : memref<16x128xf32, #tpu.memory_space<vmem>>, vector<16x128xf32>
    tpu.vector_store %arg3[%c0_4, %c0_5], %8 {strides = array<i32>} : memref<16x128xf32, #tpu.memory_space<vmem>>, vector<16x128xf32>,
    return
  }
  func.func @transform_0(%arg0: i32) -> (i32, i32, i32) {
    %c0_i32 = arith.constant 0 : i32
    %c0_i32_0 = arith.constant 0 : i32
    %c0_i32_1 = arith.constant 0 : i32
    return %arg0, %c0_i32, %c0_i32_0 : i32, i32, i32
  }
  func.func @transform_1(%arg0: i32) -> (i32, i32) {
    %c0_i32 = arith.constant 0 : i32
    %c0_i32_0 = arith.constant 0 : i32
    %c0_i32_1 = arith.constant 0 : i32
    return %c0_i32, %c0_i32_0 : i32, i32
  }
  func.func @transform_2(%arg0: i32) -> (i32, i32) {
    %c0_i32 = arith.constant 0 : i32
    %c0_i32_0 = arith.constant 0 : i32
    return %arg0, %c0_i32 : i32, i32
  }
}

</mosaic_0001>

<llo_original>
// kernel: _forward.1
$region0: #{_forward.1}
  #allocation0 [shape = 'u32[]', space=smem, size = 0x4, offset = 0x4, fixed_abs, tag = 'smem constant byte address 0x4 - core index']
  #allocation1 [shape = 'u32[144,128]{1,0:T(1,128)}', space=vmem, size = 0x12000, scoped, tag = 'internal scratch']
  %s0 = inlined_call_operand.vmem [shape: s32[1,1,16], index: 0, kind: input, shape index: {}]
  %s1 = inlined_call_operand.hbm [shape: f32[128,128], index: 1, kind: input, shape index: {}]
  %s2 = inlined_call_operand.hbm [shape: f32[16,128], index: 2, kind: output, shape index: {}]
  %s3 = sld [smem:[#allocation0]]
  $region22: #{_forward.1} parent=0
    _
  %s5 = ssub.s32 1, %s3
  %s6 = scalar_select 0, %s5, %s3
  $region1: #{_forward.1} parent=0
    #allocation2 [shape = 'u8[65536]{0}', space=vmem, size = 0x10000, scoped, tag = 'input window, operand 1, single buffered']
    #allocation3 [shape = 's32[1]{0}', space=sflag, size = 0x4, scoped, tag = 'scoped memory for _forward.1']
    #allocation4 [shape = 's32[1]{0}', space=sflag, size = 0x4, scoped, tag = 'scoped memory for _forward.1']
    #allocation5 [shape = 'u8[8192]{0}', space=vmem, size = 0x2000, scoped, tag = 'output window, operand 0, single buffered']
    %7 = vsyncpa [#allocation3], 0
    %8 = vsyncpa [#allocation4], 0
    // Predicated region
    $region2: #{_forward.1} parent=1 // pred_check
      _
    $region3: #{_forward.1} parent=1 // pred_check_branch
      %10 = sbr.rel (0) target = $region5
    $region4: #{_forward.1} parent=1 // pred_region
      _
    $region5: #{_forward.1} parent=1 // pred_fallthru
      _
    // Predicated region
    $region6: #{_forward.1} parent=1 // pred_check
      _
    $region7: #{_forward.1} parent=1 // pred_check_branch
      %12 = sbr.rel (0) target = $region9
    $region8: #{_forward.1} parent=1 // pred_region
      %s14 = ssub.s32 2048, 2048
      %15 = vsyncadd [#allocation3], %s14
      %s16 = sshll.u32 [#allocation2], 4
      %s17 = int_to_ptr.vmem [resolvable:$true] %s16
      %22 = dma.hbm_to_vmem [thread:$0]  %s1, 2048, %s17, [#allocation3], 128, 128, 8
    $region9: #{_forward.1} parent=1 // pred_fallthru
      _
    // Predicated region
    $region10: #{_forward.1} parent=1 // pred_check
      _
    $region11: #{_forward.1} parent=1 // pred_check_branch
      %24 = sbr.rel (0) target = $region13
    $region12: #{_forward.1} parent=1 // pred_region
      %25 = dma.done [#allocation3], 2048
    $region13: #{_forward.1} parent=1 // pred_fallthru
      _
    %v26 = vld [vmem:[%s0] sm:$0x1]
    %v27 = vlaneseq
    %v28 = vshrl.u32 %v27, 7
    %v29 = vadd.s32 %v28, 8
    %v30 = vadd.s32 %v28, 16
    %v31 = vadd.s32 %v28, 24
    %v32 = vadd.s32 %v28, 32
    %v33 = vadd.s32 %v28, 40
    %v34 = vadd.s32 %v28, 48
    %v35 = vadd.s32 %v28, 56
    %v36 = vadd.s32 %v28, 64
    %v37 = vadd.s32 %v28, 72
    %v38 = vadd.s32 %v28, 80
    %v39 = vadd.s32 %v28, 88
    %v40 = vadd.s32 %v28, 96
    %v41 = vadd.s32 %v28, 104
    %v42 = vadd.s32 %v28, 112
    %v43 = vadd.s32 %v28, 120
    %v44 = vlaneseq
    %v45 = vshrl.u32 %v44, 7
    %v46 = vsub.s32 0, %v45
    %v47 = vrot.slane %v26, %v46
    %vm48 = vcmp.eq.s32.totalorder %v28, %v47
    %vm49 = vcmp.eq.s32.totalorder %v29, %v47
    %vm50 = vcmp.eq.s32.totalorder %v30, %v47
    %vm51 = vcmp.eq.s32.totalorder %v31, %v47
    %vm52 = vcmp.eq.s32.totalorder %v32, %v47
    %vm53 = vcmp.eq.s32.totalorder %v33, %v47
    %vm54 = vcmp.eq.s32.totalorder %v34, %v47
    %vm55 = vcmp.eq.s32.totalorder %v35, %v47
    %vm56 = vcmp.eq.s32.totalorder %v36, %v47
    %vm57 = vcmp.eq.s32.totalorder %v37, %v47
    %vm58 = vcmp.eq.s32.totalorder %v38, %v47
    %vm59 = vcmp.eq.s32.totalorder %v39, %v47
    %vm60 = vcmp.eq.s32.totalorder %v40, %v47
    %vm61 = vcmp.eq.s32.totalorder %v41, %v47
    %vm62 = vcmp.eq.s32.totalorder %v42, %v47
    %vm63 = vcmp.eq.s32.totalorder %v43, %v47
    %v64 = vsel %vm48, 1, 0
    %v65 = vsel %vm49, 1, 0
    %v66 = vsel %vm50, 1, 0
    %v67 = vsel %vm51, 1, 0
    %v68 = vsel %vm52, 1, 0
    %v69 = vsel %vm53, 1, 0
    %v70 = vsel %vm54, 1, 0
    %v71 = vsel %vm55, 1, 0
    %v72 = vsel %vm56, 1, 0
    %v73 = vsel %vm57, 1, 0
    %v74 = vsel %vm58, 1, 0
    %v75 = vsel %vm59, 1, 0
    %v76 = vsel %vm60, 1, 0
    %v77 = vsel %vm61, 1, 0
    %v78 = vsel %vm62, 1, 0
    %v79 = vsel %vm63, 1, 0
    %v80 = vcvt.s32.f32 %v64
    %v81 = vcvt.s32.f32 %v65
    %v82 = vcvt.s32.f32 %v66
    %v83 = vcvt.s32.f32 %v67
    %v84 = vcvt.s32.f32 %v68
    %v85 = vcvt.s32.f32 %v69
    %v86 = vcvt.s32.f32 %v70
    %v87 = vcvt.s32.f32 %v71
    %v88 = vcvt.s32.f32 %v72
    %v89 = vcvt.s32.f32 %v73
    %v90 = vcvt.s32.f32 %v74
    %v91 = vcvt.s32.f32 %v75
    %v92 = vcvt.s32.f32 %v76
    %v93 = vcvt.s32.f32 %v77
    %v94 = vcvt.s32.f32 %v78
    %v95 = vcvt.s32.f32 %v79
    %v96 = vld [vmem:[#allocation2] sm:$0xff]
    %v97 = vld [vmem:[#allocation2 + $0x8] sm:$0xff]
    %v98 = vld [vmem:[#allocation2 + $0x10] sm:$0xff]
    %v99 = vld [vmem:[#allocation2 + $0x18] sm:$0xff]
    %v100 = vld [vmem:[#allocation2 + $0x20] sm:$0xff]
    %v101 = vld [vmem:[#allocation2 + $0x28] sm:$0xff]
    %v102 = vld [vmem:[#allocation2 + $0x30] sm:$0xff]
    %v103 = vld [vmem:[#allocation2 + $0x38] sm:$0xff]
    %v104 = vld [vmem:[#allocation2 + $0x40] sm:$0xff]
    %v105 = vld [vmem:[#allocation2 + $0x48] sm:$0xff]
    %v106 = vld [vmem:[#allocation2 + $0x50] sm:$0xff]
    %v107 = vld [vmem:[#allocation2 + $0x58] sm:$0xff]
    %v108 = vld [vmem:[#allocation2 + $0x60] sm:$0xff]
    %v109 = vld [vmem:[#allocation2 + $0x68] sm:$0xff]
    %v110 = vld [vmem:[#allocation2 + $0x70] sm:$0xff]
    %v111 = vld [vmem:[#allocation2 + $0x78] sm:$0xff]
    %112 = vxpose.xlu0.b32.start [1/16] %v80, 128
    %113 = vxpose.xlu0.b32.cont [2/16] %v81, 128
    %114 = vxpose.xlu0.b32.cont [3/16] %v82, 128
    %115 = vxpose.xlu0.b32.cont [4/16] %v83, 128
    %116 = vxpose.xlu0.b32.cont [5/16] %v84, 128
    %117 = vxpose.xlu0.b32.cont [6/16] %v85, 128
    %118 = vxpose.xlu0.b32.cont [7/16] %v86, 128
    %119 = vxpose.xlu0.b32.cont [8/16] %v87, 128
    %120 = vxpose.xlu0.b32.cont [9/16] %v88, 128
    %121 = vxpose.xlu0.b32.cont [10/16] %v89, 128
    %122 = vxpose.xlu0.b32.cont [11/16] %v90, 128
    %123 = vxpose.xlu0.b32.cont [12/16] %v91, 128
    %124 = vxpose.xlu0.b32.cont [13/16] %v92, 128
    %125 = vxpose.xlu0.b32.cont [14/16] %v93, 128
    %126 = vxpose.xlu0.b32.cont [15/16] %v94, 128
    %127 = vxpose.xlu0.b32.end [16/16] %v95, 128
    %v128 = vpop.trf.xlu0
    %v129 = vpop.trf.xlu0
    %v130 = vpop.trf.xlu0
    %v131 = vpop.trf.xlu0
    %v132 = vpop.trf.xlu0
    %v133 = vpop.trf.xlu0
    %v134 = vpop.trf.xlu0
    %v135 = vpop.trf.xlu0
    %v136 = vpop.trf.xlu0
    %v137 = vpop.trf.xlu0
    %v138 = vpop.trf.xlu0
    %v139 = vpop.trf.xlu0
    %v140 = vpop.trf.xlu0
    %v141 = vpop.trf.xlu0
    %v142 = vpop.trf.xlu0
    %v143 = vpop.trf.xlu0
    %144 = vmatprep.subr.mxu0 0.0
    %145 = vmatpush1.msra.mxu0 %v111
    %146 = vmatprep.subr.mxu0 0.0
    %147 = vmatpush1.msra.mxu0 %v110
    %148 = vmatprep.subr.mxu0 0.0
    %149 = vmatpush1.msra.mxu0 %v109
    %150 = vmatprep.subr.mxu0 0.0
    %151 = vmatpush1.msra.mxu0 %v108
    %152 = vmatprep.subr.mxu0 0.0
    %153 = vmatpush1.msra.mxu0 %v107
    %154 = vmatprep.subr.mxu0 0.0
    %155 = vmatpush1.msra.mxu0 %v106
    %156 = vmatprep.subr.mxu0 0.0
    %157 = vmatpush1.msra.mxu0 %v105
    %158 = vmatprep.subr.mxu0 0.0
    %159 = vmatpush1.msra.mxu0 %v104
    %160 = vmatprep.subr.mxu0 0.0
    %161 = vmatpush1.msra.mxu0 %v103
    %162 = vmatprep.subr.mxu0 0.0
    %163 = vmatpush1.msra.mxu0 %v102
    %164 = vmatprep.subr.mxu0 0.0
    %165 = vmatpush1.msra.mxu0 %v101
    %166 = vmatprep.subr.mxu0 0.0
    %167 = vmatpush1.msra.mxu0 %v100
    %168 = vmatprep.subr.mxu0 0.0
    %169 = vmatpush1.msra.mxu0 %v99
    %170 = vmatprep.subr.mxu0 0.0
    %171 = vmatpush1.msra.mxu0 %v98
    %172 = vmatprep.subr.mxu0 0.0
    %173 = vmatpush1.msra.mxu0 %v97
    %174 = vmatprep.subr.mxu0 0.0
    %175 = vmatpush1.msra.mxu0 %v96
    %176 = vmatprep.subr.mxu0 0.0
    %177 = vmatpush2.msra.mxu0 0.0
    %178 = vmatprep.subr.mxu0 0.0
    %179 = vmatpush2.msra.mxu0 0.0
    %180 = vmatprep.subr.mxu0 0.0
    %181 = vmatpush2.msra.mxu0 0.0
    %182 = vmatprep.subr.mxu0 0.0
    %183 = vmatpush2.msra.mxu0 0.0
    %184 = vmatprep.subr.mxu0 0.0
    %185 = vmatpush2.msra.mxu0 0.0
    %186 = vmatprep.subr.mxu0 0.0
    %187 = vmatpush2.msra.mxu0 0.0
    %188 = vmatprep.subr.mxu0 0.0
    %189 = vmatpush2.msra.mxu0 0.0
    %190 = vmatprep.subr.mxu0 0.0
    %191 = vmatpush2.msra.mxu0 0.0
    %192 = vmatprep.subr.mxu0 0.0
    %193 = vmatpush2.msra.mxu0 0.0
    %194 = vmatprep.subr.mxu0 0.0
    %195 = vmatpush2.msra.mxu0 0.0
    %196 = vmatprep.subr.mxu0 0.0
    %197 = vmatpush2.msra.mxu0 0.0
    %198 = vmatprep.subr.mxu0 0.0
    %199 = vmatpush2.msra.mxu0 0.0
    %200 = vmatprep.subr.mxu0 0.0
    %201 = vmatpush2.msra.mxu0 0.0
    %202 = vmatprep.subr.mxu0 0.0
    %203 = vmatpush2.msra.mxu0 0.0
    %204 = vmatprep.subr.mxu0 0.0
    %205 = vmatpush2.msra.mxu0 0.0
    %206 = vmatprep.subr.mxu0 0.0
    %207 = vmatpush2.msra.mxu0 0.0
    %208 = vmatprep.mubr.f32.mxu0 0.0
    %209 = vmatmul.mubr.f32.gmra.mxu0 %v128
    %v210 = vpop.f32.mrf.mxu0
    %v211 = vadd.f32 0.0, %v210
    %v212 = vpop.f32.mrf.mxu0
    %213 = vmatprep.mubr.f32.mxu0 0.0
    %214 = vmatmul.mubr.f32.gmra.mxu0 %v129
    %v215 = vpop.f32.mrf.mxu0
    %v216 = vadd.f32 0.0, %v215
    %v217 = vpop.f32.mrf.mxu0
    %218 = vdwg.mxu0
    %219 = vst [vmem:[#allocation5] sm:$0xff] %v211
    %220 = vst [vmem:[#allocation5 + $0x8] sm:$0xff] %v216
    // Predicated region
    $region14: #{_forward.1} parent=1 // pred_check
      _
    $region15: #{_forward.1} parent=1 // pred_check_branch
      %222 = sbr.rel (0) target = $region17
    $region16: #{_forward.1} parent=1 // pred_region
      %s224 = ssub.s32 256, 256
      %225 = vsyncadd [#allocation4], %s224
      %s226 = sshll.u32 [#allocation5], 4
      %s227 = int_to_ptr.vmem [resolvable:$true] %s226
      %232 = dma.vmem_to_hbm [thread:$0]  %s227, 256, %s2, [#allocation4], 128, 128, 8
    $region17: #{_forward.1} parent=1 // pred_fallthru
      _
    // Predicated region
    $region18: #{_forward.1} parent=1 // pred_check
      _
    $region19: #{_forward.1} parent=1 // pred_check_branch
      %234 = sbr.rel (0) target = $region21
    $region20: #{_forward.1} parent=1 // pred_region
      %235 = dma.done [#allocation4], 256
    $region21: #{_forward.1} parent=1 // pred_fallthru
      _
    %236 = vsyncpa [#allocation3], 1
    %237 = vsyncpa [#allocation4], 1

</llo_original>
